<compile_context>
chip_gen: v7x
topology: tpu7x:2x2x1
jax: 0.10.0
libtpu: 0.0.40
codegen_flags: <defaults>
</compile_context>

<pallas_src>
import jax
import jax.numpy as jnp
from jax import lax
from jax.experimental import pallas as pl
from jax.experimental.pallas import tpu as pltpu


def _make_morning_kernel(h_dim, chunk_rows, n_chunks):
    """Build the kernel for a fixed hidden size / chunking (all static)."""

    def kernel(x_ref, w1_ref, b1_ref, w2_ref, b2_ref, o_ref):
        # x_ref / o_ref : (tile_rows, 128) f32 in VMEM (lane-dense batch tile)
        # w1_ref, b1_ref, w2_ref : (H,) f32 in SMEM (folded tanh weights)
        # b2_ref : (1,) f32 in SMEM (folded output bias)

        # Hoist the tiny SMEM scalar weights out of the row-chunk loop.
        w1s = [w1_ref[j] for j in range(h_dim)]
        b1s = [b1_ref[j] for j in range(h_dim)]
        w2s = [w2_ref[j] for j in range(h_dim)]
        bias = b2_ref[0]

        def chunk_body(c, carry):
            r0 = pl.multiple_of(c * chunk_rows, chunk_rows)
            x = x_ref[pl.ds(r0, chunk_rows), :]          # <= 8 vregs, stays live
            acc = jnp.full_like(x, bias)                  # init from folded bias
            for j in range(h_dim):                        # static H -> unrolled
                t = jnp.tanh(x * w1s[j] + b1s[j])         # VPU FMA + EUP tanh
                acc = acc + t * w2s[j]                     # VPU FMA
            o_ref[pl.ds(r0, chunk_rows), :] = acc.astype(o_ref.dtype)
            return carry

        lax.fori_loop(0, n_chunks, chunk_body, 0)

    return kernel


def morning_net(x, w1, b1, w2, b2, *, target_steps=8, max_tile_rows=1024,
                max_chunk_rows=64, lanes=128):
    """Forward pass of MorningNet.

    x: (N, 1) f32.  w1: (1, H), b1: (H,), w2: (H, 1), b2: (1,).
    Returns (N, 1) f32.

    The batch is flattened to a lane-dense (rows, 128) view.  tile_rows is
    chosen so the grid has ~target_steps steps (>= 2 for v7x megacore) while
    bounding the zero-padded tail, capped at max_tile_rows (1024 rows =
    512 KiB f32 per buffer -> ~2 MiB with in+out double-buffering, safe on
    v5e/v6e/v7x scoped-VMEM defaults).
    """
    assert x.ndim == 2 and x.shape[1] == 1, "MorningNet expects (N, 1) input"
    n = x.shape[0]
    h = w1.shape[1]

    def _cdiv(a, b):
        return -(-a // b)

    def _round_up(a, b):
        return _cdiv(a, b) * b

    # --- Fold sigmoid -> tanh constants into the (tiny) weights -------------
    #   sigmoid(z) = 0.5 * tanh(z / 2) + 0.5
    #   y = (b2 + 0.5*sum(w2)) + sum_j (0.5*w2_j) * tanh((0.5*w1_j)*x + 0.5*b1_j)
    w1f = (0.5 * w1).reshape(-1).astype(jnp.float32)
    b1f = (0.5 * b1).reshape(-1).astype(jnp.float32)
    w2f = (0.5 * w2).reshape(-1).astype(jnp.float32)
    b2f = (b2.reshape(-1) + 0.5 * jnp.sum(w2)).astype(jnp.float32)

    # --- Adaptive lane-dense tiling -----------------------------------------
    rows_needed = _cdiv(n, lanes)
    tile_rows = min(max_tile_rows,
                    max(8, _round_up(_cdiv(rows_needed, target_steps), 8)))
    # Largest register-friendly chunk that divides the tile (tile_rows % 8 == 0).
    chunk_rows = next(c for c in (64, 32, 16, 8)
                      if c <= max_chunk_rows and tile_rows % c == 0)
    n_chunks = tile_rows // chunk_rows
    n_tiles = _cdiv(rows_needed, tile_rows)
    rows_total = n_tiles * tile_rows
    n_pad = rows_total * lanes

    xf = jnp.pad(x.reshape(-1), (0, n_pad - n))
    x2d = xf.reshape(rows_total, lanes)

    kernel = _make_morning_kernel(h, chunk_rows, n_chunks)

    out2d = pl.pallas_call(
        kernel,
        out_shape=jax.ShapeDtypeStruct(x2d.shape, x.dtype),
        grid_spec=pltpu.PrefetchScalarGridSpec(
            num_scalar_prefetch=0,
            grid=(n_tiles,),
            in_specs=[
                # lane-dense batch tile (full 128-lane unmasked loads/stores)
                pl.BlockSpec((tile_rows, lanes), lambda i: (i, 0)),
                # tiny folded weights/biases: whole arrays in SMEM
                pl.BlockSpec(memory_space=pltpu.MemorySpace.SMEM),  # w1' (H,)
                pl.BlockSpec(memory_space=pltpu.MemorySpace.SMEM),  # b1' (H,)
                pl.BlockSpec(memory_space=pltpu.MemorySpace.SMEM),  # w2' (H,)
                pl.BlockSpec(memory_space=pltpu.MemorySpace.SMEM),  # b2' (1,)
            ],
            out_specs=pl.BlockSpec((tile_rows, lanes), lambda i: (i, 0)),
        ),
        compiler_params=pltpu.CompilerParams(
            dimension_semantics=("parallel",)),   # megacore-splittable batch axis
    )(x2d, w1f, b1f, w2f, b2f)

    # Drop the padding and restore the (N, 1) module output shape.
    return out2d.reshape(-1)[:n].reshape(n, 1)


def morning_net_ref(x, w1, b1, w2, b2):
    h = jax.nn.sigmoid(x @ w1 + b1[None, :])
    return h @ w2 + b2[None, :]


if __name__ == "__main__":
    n_hidden = 32          # n_hidden_neurons
    batch = 3000           # small demo batch ("hour of day" samples)

    key = jax.random.PRNGKey(0)
    kx, k1, kb1, k2, kb2 = jax.random.split(key, 5)

    # PyTorch-Linear-style init: U(-1/sqrt(fan_in), 1/sqrt(fan_in)).
    bound1 = 1.0 / jnp.sqrt(1.0)        # fc1: fan_in = 1
    bound2 = 1.0 / jnp.sqrt(n_hidden)   # fc2: fan_in = n_hidden
    w1 = jax.random.uniform(k1, (1, n_hidden), jnp.float32, -bound1, bound1)
    b1 = jax.random.uniform(kb1, (n_hidden,), jnp.float32, -bound1, bound1)
    w2 = jax.random.uniform(k2, (n_hidden, 1), jnp.float32, -bound2, bound2)
    b2 = jax.random.uniform(kb2, (1,), jnp.float32, -bound2, bound2)

    x = jax.random.uniform(kx, (batch, 1), jnp.float32, 0.0, 24.0)

    # Small demo tiling: 2 grid steps (exercises the parallel grid) and
    # 2 row-chunks per tile (exercises the in-kernel fori_loop path).
    # Production sizes use the defaults (target_steps=8, 64-row chunks).
    out = morning_net(x, w1, b1, w2, b2, target_steps=2, max_chunk_rows=8)
    out = jax.block_until_ready(out)

    ref = morning_net_ref(x, w1, b1, w2, b2)
    assert out.shape == (batch, 1)
    assert jnp.allclose(out, ref, atol=1e-4, rtol=1e-4), "mismatch vs reference"

    print("KERNEL_OK")
</pallas_src>

<mosaic_0001>
module attributes {stable_mosaic.version = 11 : i64} {
  func.func @kernel(%arg0: i32, %arg1: memref<16x128xf32, #tpu.memory_space<vmem>>, %arg2: memref<32xf32, #tpu.memory_space<smem>>, %arg3: memref<32xf32, #tpu.memory_space<smem>>, %arg4: memref<32xf32, #tpu.memory_space<smem>>, %arg5: memref<1xf32, #tpu.memory_space<smem>>, %arg6: memref<16x128xf32, #tpu.memory_space<vmem>>) attributes {dimension_semantics = [#tpu.dimension_semantics<parallel>], iteration_bounds = array<i64: 2>, scalar_prefetch = 0 : i64, scratch_operands = 0 : i64, tpu.core_type = #tpu.core_type<tc>, window_params = [{transform_indices = @transform_0, window_bounds = array<i64: 16, 128>}, {transform_indices = @transform_1, window_bounds = array<i64: 32>}, {transform_indices = @transform_2, window_bounds = array<i64: 32>}, {transform_indices = @transform_3, window_bounds = array<i64: 32>}, {transform_indices = @transform_4, window_bounds = array<i64: 1>}, {transform_indices = @transform_5, window_bounds = array<i64: 16, 128>}]} {
    %c0 = arith.constant 0 : index
    %0 = memref.load %arg2[%c0] : memref<32xf32, #tpu.memory_space<smem>>
    %c1 = arith.constant 1 : index
    %1 = memref.load %arg2[%c1] : memref<32xf32, #tpu.memory_space<smem>>
    %c2 = arith.constant 2 : index
    %2 = memref.load %arg2[%c2] : memref<32xf32, #tpu.memory_space<smem>>
    %c3 = arith.constant 3 : index
    %3 = memref.load %arg2[%c3] : memref<32xf32, #tpu.memory_space<smem>>
    %c4 = arith.constant 4 : index
    %4 = memref.load %arg2[%c4] : memref<32xf32, #tpu.memory_space<smem>>
    %c5 = arith.constant 5 : index
    %5 = memref.load %arg2[%c5] : memref<32xf32, #tpu.memory_space<smem>>
    %c6 = arith.constant 6 : index
    %6 = memref.load %arg2[%c6] : memref<32xf32, #tpu.memory_space<smem>>
    %c7 = arith.constant 7 : index
    %7 = memref.load %arg2[%c7] : memref<32xf32, #tpu.memory_space<smem>>
    %c8 = arith.constant 8 : index
    %8 = memref.load %arg2[%c8] : memref<32xf32, #tpu.memory_space<smem>>
    %c9 = arith.constant 9 : index
    %9 = memref.load %arg2[%c9] : memref<32xf32, #tpu.memory_space<smem>>
    %c10 = arith.constant 10 : index
    %10 = memref.load %arg2[%c10] : memref<32xf32, #tpu.memory_space<smem>>
    %c11 = arith.constant 11 : index
    %11 = memref.load %arg2[%c11] : memref<32xf32, #tpu.memory_space<smem>>
    %c12 = arith.constant 12 : index
    %12 = memref.load %arg2[%c12] : memref<32xf32, #tpu.memory_space<smem>>
    %c13 = arith.constant 13 : index
    %13 = memref.load %arg2[%c13] : memref<32xf32, #tpu.memory_space<smem>>
    %c14 = arith.constant 14 : index
    %14 = memref.load %arg2[%c14] : memref<32xf32, #tpu.memory_space<smem>>
    %c15 = arith.constant 15 : index
    %15 = memref.load %arg2[%c15] : memref<32xf32, #tpu.memory_space<smem>>
    %c16 = arith.constant 16 : index
    %16 = memref.load %arg2[%c16] : memref<32xf32, #tpu.memory_space<smem>>
    %c17 = arith.constant 17 : index
    %17 = memref.load %arg2[%c17] : memref<32xf32, #tpu.memory_space<smem>>
    %c18 = arith.constant 18 : index
    %18 = memref.load %arg2[%c18] : memref<32xf32, #tpu.memory_space<smem>>
    %c19 = arith.constant 19 : index
    %19 = memref.load %arg2[%c19] : memref<32xf32, #tpu.memory_space<smem>>
    %c20 = arith.constant 20 : index
    %20 = memref.load %arg2[%c20] : memref<32xf32, #tpu.memory_space<smem>>
    %c21 = arith.constant 21 : index
    %21 = memref.load %arg2[%c21] : memref<32xf32, #tpu.memory_space<smem>>
    %c22 = arith.constant 22 : index
    %22 = memref.load %arg2[%c22] : memref<32xf32, #tpu.memory_space<smem>>
    %c23 = arith.constant 23 : index
    %23 = memref.load %arg2[%c23] : memref<32xf32, #tpu.memory_space<smem>>
    %c24 = arith.constant 24 : index
    %24 = memref.load %arg2[%c24] : memref<32xf32, #tpu.memory_space<smem>>
    %c25 = arith.constant 25 : index
    %25 = memref.load %arg2[%c25] : memref<32xf32, #tpu.memory_space<smem>>
    %c26 = arith.constant 26 : index
    %26 = memref.load %arg2[%c26] : memref<32xf32, #tpu.memory_space<smem>>
    %c27 = arith.constant 27 : index
    %27 = memref.load %arg2[%c27] : memref<32xf32, #tpu.memory_space<smem>>
    %c28 = arith.constant 28 : index
    %28 = memref.load %arg2[%c28] : memref<32xf32, #tpu.memory_space<smem>>
    %c29 = arith.constant 29 : index
    %29 = memref.load %arg2[%c29] : memref<32xf32, #tpu.memory_space<smem>>
    %c30 = arith.constant 30 : index
    %30 = memref.load %arg2[%c30] : memref<32xf32, #tpu.memory_space<smem>>
    %c31 = arith.constant 31 : index
    %31 = memref.load %arg2[%c31] : memref<32xf32, #tpu.memory_space<smem>>
    %c0_0 = arith.constant 0 : index
    %32 = memref.load %arg3[%c0_0] : memref<32xf32, #tpu.memory_space<smem>>
    %c1_1 = arith.constant 1 : index
    %33 = memref.load %arg3[%c1_1] : memref<32xf32, #tpu.memory_space<smem>>
    %c2_2 = arith.constant 2 : index
    %34 = memref.load %arg3[%c2_2] : memref<32xf32, #tpu.memory_space<smem>>
    %c3_3 = arith.constant 3 : index
    %35 = memref.load %arg3[%c3_3] : memref<32xf32, #tpu.memory_space<smem>>
    %c4_4 = arith.constant 4 : index
    %36 = memref.load %arg3[%c4_4] : memref<32xf32, #tpu.memory_space<smem>>
    %c5_5 = arith.constant 5 : index
    %37 = memref.load %arg3[%c5_5] : memref<32xf32, #tpu.memory_space<smem>>
    %c6_6 = arith.constant 6 : index
    %38 = memref.load %arg3[%c6_6] : memref<32xf32, #tpu.memory_space<smem>>
    %c7_7 = arith.constant 7 : index
    %39 = memref.load %arg3[%c7_7] : memref<32xf32, #tpu.memory_space<smem>>
    %c8_8 = arith.constant 8 : index
    %40 = memref.load %arg3[%c8_8] : memref<32xf32, #tpu.memory_space<smem>>
    %c9_9 = arith.constant 9 : index
    %41 = memref.load %arg3[%c9_9] : memref<32xf32, #tpu.memory_space<smem>>
    %c10_10 = arith.constant 10 : index
    %42 = memref.load %arg3[%c10_10] : memref<32xf32, #tpu.memory_space<smem>>
    %c11_11 = arith.constant 11 : index
    %43 = memref.load %arg3[%c11_11] : memref<32xf32, #tpu.memory_space<smem>>
    %c12_12 = arith.constant 12 : index
    %44 = memref.load %arg3[%c12_12] : memref<32xf32, #tpu.memory_space<smem>>
    %c13_13 = arith.constant 13 : index
    %45 = memref.load %arg3[%c13_13] : memref<32xf32, #tpu.memory_space<smem>>
    %c14_14 = arith.constant 14 : index
    %46 = memref.load %arg3[%c14_14] : memref<32xf32, #tpu.memory_space<smem>>
    %c15_15 = arith.constant 15 : index
    %47 = memref.load %arg3[%c15_15] : memref<32xf32, #tpu.memory_space<smem>>
    %c16_16 = arith.constant 16 : index
    %48 = memref.load %arg3[%c16_16] : memref<32xf32, #tpu.memory_space<smem>>
    %c17_17 = arith.constant 17 : index
    %49 = memref.load %arg3[%c17_17] : memref<32xf32, #tpu.memory_space<smem>>
    %c18_18 = arith.constant 18 : index
    %50 = memref.load %arg3[%c18_18] : memref<32xf32, #tpu.memory_space<smem>>
    %c19_19 = arith.constant 19 : index
    %51 = memref.load %arg3[%c19_19] : memref<32xf32, #tpu.memory_space<smem>>
    %c20_20 = arith.constant 20 : index
    %52 = memref.load %arg3[%c20_20] : memref<32xf32, #tpu.memory_space<smem>>
    %c21_21 = arith.constant 21 : index
    %53 = memref.load %arg3[%c21_21] : memref<32xf32, #tpu.memory_space<smem>>
    %c22_22 = arith.constant 22 : index
    %54 = memref.load %arg3[%c22_22] : memref<32xf32, #tpu.memory_space<smem>>
    %c23_23 = arith.constant 23 : index
    %55 = memref.load %arg3[%c23_23] : memref<32xf32, #tpu.memory_space<smem>>
    %c24_24 = arith.constant 24 : index
    %56 = memref.load %arg3[%c24_24] : memref<32xf32, #tpu.memory_space<smem>>
    %c25_25 = arith.constant 25 : index
    %57 = memref.load %arg3[%c25_25] : memref<32xf32, #tpu.memory_space<smem>>
    %c26_26 = arith.constant 26 : index
    %58 = memref.load %arg3[%c26_26] : memref<32xf32, #tpu.memory_space<smem>>
    %c27_27 = arith.constant 27 : index
    %59 = memref.load %arg3[%c27_27] : memref<32xf32, #tpu.memory_space<smem>>
    %c28_28 = arith.constant 28 : index
    %60 = memref.load %arg3[%c28_28] : memref<32xf32, #tpu.memory_space<smem>>
    %c29_29 = arith.constant 29 : index
    %61 = memref.load %arg3[%c29_29] : memref<32xf32, #tpu.memory_space<smem>>
    %c30_30 = arith.constant 30 : index
    %62 = memref.load %arg3[%c30_30] : memref<32xf32, #tpu.memory_space<smem>>
    %c31_31 = arith.constant 31 : index
    %63 = memref.load %arg3[%c31_31] : memref<32xf32, #tpu.memory_space<smem>>
    %c0_32 = arith.constant 0 : index
    %64 = memref.load %arg4[%c0_32] : memref<32xf32, #tpu.memory_space<smem>>
    %c1_33 = arith.constant 1 : index
    %65 = memref.load %arg4[%c1_33] : memref<32xf32, #tpu.memory_space<smem>>
    %c2_34 = arith.constant 2 : index
    %66 = memref.load %arg4[%c2_34] : memref<32xf32, #tpu.memory_space<smem>>
    %c3_35 = arith.constant 3 : index
    %67 = memref.load %arg4[%c3_35] : memref<32xf32, #tpu.memory_space<smem>>
    %c4_36 = arith.constant 4 : index
    %68 = memref.load %arg4[%c4_36] : memref<32xf32, #tpu.memory_space<smem>>
    %c5_37 = arith.constant 5 : index
    %69 = memref.load %arg4[%c5_37] : memref<32xf32, #tpu.memory_space<smem>>
    %c6_38 = arith.constant 6 : index
    %70 = memref.load %arg4[%c6_38] : memref<32xf32, #tpu.memory_space<smem>>
    %c7_39 = arith.constant 7 : index
    %71 = memref.load %arg4[%c7_39] : memref<32xf32, #tpu.memory_space<smem>>
    %c8_40 = arith.constant 8 : index
    %72 = memref.load %arg4[%c8_40] : memref<32xf32, #tpu.memory_space<smem>>
    %c9_41 = arith.constant 9 : index
    %73 = memref.load %arg4[%c9_41] : memref<32xf32, #tpu.memory_space<smem>>
    %c10_42 = arith.constant 10 : index
    %74 = memref.load %arg4[%c10_42] : memref<32xf32, #tpu.memory_space<smem>>
    %c11_43 = arith.constant 11 : index
    %75 = memref.load %arg4[%c11_43] : memref<32xf32, #tpu.memory_space<smem>>
    %c12_44 = arith.constant 12 : index
    %76 = memref.load %arg4[%c12_44] : memref<32xf32, #tpu.memory_space<smem>>
    %c13_45 = arith.constant 13 : index
    %77 = memref.load %arg4[%c13_45] : memref<32xf32, #tpu.memory_space<smem>>
    %c14_46 = arith.constant 14 : index
    %78 = memref.load %arg4[%c14_46] : memref<32xf32, #tpu.memory_space<smem>>
    %c15_47 = arith.constant 15 : index
    %79 = memref.load %arg4[%c15_47] : memref<32xf32, #tpu.memory_space<smem>>
    %c16_48 = arith.constant 16 : index
    %80 = memref.load %arg4[%c16_48] : memref<32xf32, #tpu.memory_space<smem>>
    %c17_49 = arith.constant 17 : index
    %81 = memref.load %arg4[%c17_49] : memref<32xf32, #tpu.memory_space<smem>>
    %c18_50 = arith.constant 18 : index
    %82 = memref.load %arg4[%c18_50] : memref<32xf32, #tpu.memory_space<smem>>
    %c19_51 = arith.constant 19 : index
    %83 = memref.load %arg4[%c19_51] : memref<32xf32, #tpu.memory_space<smem>>
    %c20_52 = arith.constant 20 : index
    %84 = memref.load %arg4[%c20_52] : memref<32xf32, #tpu.memory_space<smem>>
    %c21_53 = arith.constant 21 : index
    %85 = memref.load %arg4[%c21_53] : memref<32xf32, #tpu.memory_space<smem>>
    %c22_54 = arith.constant 22 : index
    %86 = memref.load %arg4[%c22_54] : memref<32xf32, #tpu.memory_space<smem>>
    %c23_55 = arith.constant 23 : index
    %87 = memref.load %arg4[%c23_55] : memref<32xf32, #tpu.memory_space<smem>>
    %c24_56 = arith.constant 24 : index
    %88 = memref.load %arg4[%c24_56] : memref<32xf32, #tpu.memory_space<smem>>
    %c25_57 = arith.constant 25 : index
    %89 = memref.load %arg4[%c25_57] : memref<32xf32, #tpu.memory_space<smem>>
    %c26_58 = arith.constant 26 : index
    %90 = memref.load %arg4[%c26_58] : memref<32xf32, #tpu.memory_space<smem>>
    %c27_59 = arith.constant 27 : index
    %91 = memref.load %arg4[%c27_59] : memref<32xf32, #tpu.memory_space<smem>>
    %c28_60 = arith.constant 28 : index
    %92 = memref.load %arg4[%c28_60] : memref<32xf32, #tpu.memory_space<smem>>
    %c29_61 = arith.constant 29 : index
    %93 = memref.load %arg4[%c29_61] : memref<32xf32, #tpu.memory_space<smem>>
    %c30_62 = arith.constant 30 : index
    %94 = memref.load %arg4[%c30_62] : memref<32xf32, #tpu.memory_space<smem>>
    %c31_63 = arith.constant 31 : index
    %95 = memref.load %arg4[%c31_63] : memref<32xf32, #tpu.memory_space<smem>>
    %c0_64 = arith.constant 0 : index
    %96 = memref.load %arg5[%c0_64] : memref<1xf32, #tpu.memory_space<smem>>
    %c0_i32 = arith.constant 0 : i32
    %c2_i32 = arith.constant 2 : i32
    %97 = arith.addi %c0_i32, %c2_i32 : i32
    %c1_i32 = arith.constant 1 : i32
    scf.for %arg7 = %c0_i32 to %97 step %c1_i32  : i32 {
      %c8_i32 = arith.constant 8 : i32
      %98 = arith.muli %arg7, %c8_i32 : i32
      %99 = tpu.assume_multiple %98, 8 : i32
      %100 = arith.index_cast %99 : i32 to index
      %c0_66 = arith.constant 0 : index
      %101 = vector.load %arg1[%100, %c0_66] : memref<16x128xf32, #tpu.memory_space<vmem>>, vector<8x128xf32>
      %102 = vector.broadcast %96 : f32 to vector<8x128xf32>
      %103 = vector.broadcast %0 : f32 to vector<8x128xf32>
      %104 = arith.mulf %101, %103 : vector<8x128xf32>
      %105 = vector.broadcast %32 : f32 to vector<8x128xf32>
      %106 = arith.addf %104, %105 : vector<8x128xf32>
      %107 = math.tanh %106 : vector<8x128xf32>
      %108 = vector.broadcast %64 : f32 to vector<8x128xf32>
      %109 = arith.mulf %107, %108 : vector<8x128xf32>
      %110 = arith.addf %102, %109 : vector<8x128xf32>
      %111 = vector.broadcast %1 : f32 to vector<8x128xf32>
      %112 = arith.mulf %101, %111 : vector<8x128xf32>
      %113 = vector.broadcast %33 : f32 to vector<8x128xf32>
      %114 = arith.addf %112, %113 : vector<8x128xf32>
      %115 = math.tanh %114 : vector<8x128xf32>
      %116 = vector.broadcast %65 : f32 to vector<8x128xf32>
      %117 = arith.mulf %115, %116 : vector<8x128xf32>
      %118 = arith.addf %110, %117 : vector<8x128xf32>
      %119 = vector.broadcast %2 : f32 to vector<8x128xf32>
      %120 = arith.mulf %101, %119 : vector<8x128xf32>
      %121 = vector.broadcast %34 : f32 to vector<8x128xf32>
      %122 = arith.addf %120, %121 : vector<8x128xf32>
      %123 = math.tanh %122 : vector<8x128xf32>
      %124 = vector.broadcast %66 : f32 to vector<8x128xf32>
      %125 = arith.mulf %123, %124 : vector<8x128xf32>
      %126 = arith.addf %118, %125 : vector<8x128xf32>
      %127 = vector.broadcast %3 : f32 to vector<8x128xf32>
      %128 = arith.mulf %101, %127 : vector<8x128xf32>
      %129 = vector.broadcast %35 : f32 to vector<8x128xf32>
      %130 = arith.addf %128, %129 : vector<8x128xf32>
      %131 = math.tanh %130 : vector<8x128xf32>
      %132 = vector.broadcast %67 : f32 to vector<8x128xf32>
      %133 = arith.mulf %131, %132 : vector<8x128xf32>
      %134 = arith.addf %126, %133 : vector<8x128xf32>
      %135 = vector.broadcast %4 : f32 to vector<8x128xf32>
      %136 = arith.mulf %101, %135 : vector<8x128xf32>
      %137 = vector.broadcast %36 : f32 to vector<8x128xf32>
      %138 = arith.addf %136, %137 : vector<8x128xf32>
      %139 = math.tanh %138 : vector<8x128xf32>
      %140 = vector.broadcast %68 : f32 to vector<8x128xf32>
      %141 = arith.mulf %139, %140 : vector<8x128xf32>
      %142 = arith.addf %134, %141 : vector<8x128xf32>
      %143 = vector.broadcast %5 : f32 to vector<8x128xf32>
      %144 = arith.mulf %101, %143 : vector<8x128xf32>
      %145 = vector.broadcast %37 : f32 to vector<8x128xf32>
      %146 = arith.addf %144, %145 : vector<8x128xf32>
      %147 = math.tanh %146 : vector<8x128xf32>
      %148 = vector.broadcast %69 : f32 to vector<8x128xf32>
      %149 = arith.mulf %147, %148 : vector<8x128xf32>
      %150 = arith.addf %142, %149 : vector<8x128xf32>
      %151 = vector.broadcast %6 : f32 to vector<8x128xf32>
      %152 = arith.mulf %101, %151 : vector<8x128xf32>
      %153 = vector.broadcast %38 : f32 to vector<8x128xf32>
      %154 = arith.addf %152, %153 : vector<8x128xf32>
      %155 = math.tanh %154 : vector<8x128xf32>
      %156 = vector.broadcast %70 : f32 to vector<8x128xf32>
      %157 = arith.mulf %155, %156 : vector<8x128xf32>
      %158 = arith.addf %150, %157 : vector<8x128xf32>
      %159 = vector.broadcast %7 : f32 to vector<8x128xf32>
      %160 = arith.mulf %101, %159 : vector<8x128xf32>
      %161 = vector.broadcast %39 : f32 to vector<8x128xf32>
      %162 = arith.addf %160, %161 : vector<8x128xf32>
      %163 = math.tanh %162 : vector<8x128xf32>
      %164 = vector.broadcast %71 : f32 to vector<8x128xf32>
      %165 = arith.mulf %163, %164 : vector<8x128xf32>
      %166 = arith.addf %158, %165 : vector<8x128xf32>
      %167 = vector.broadcast %8 : f32 to vector<8x128xf32>
      %168 = arith.mulf %101, %167 : vector<8x128xf32>
      %169 = vector.broadcast %40 : f32 to vector<8x128xf32>
      %170 = arith.addf %168, %169 : vector<8x128xf32>
      %171 = math.tanh %170 : vector<8x128xf32>
      %172 = vector.broadcast %72 : f32 to vector<8x128xf32>
      %173 = arith.mulf %171, %172 : vector<8x128xf32>
      %174 = arith.addf %166, %173 : vector<8x128xf32>
      %175 = vector.broadcast %9 : f32 to vector<8x128xf32>
      %176 = arith.mulf %101, %175 : vector<8x128xf32>
      %177 = vector.broadcast %41 : f32 to vector<8x128xf32>
      %178 = arith.addf %176, %177 : vector<8x128xf32>
      %179 = math.tanh %178 : vector<8x128xf32>
      %180 = vector.broadcast %73 : f32 to vector<8x128xf32>
      %181 = arith.mulf %179, %180 : vector<8x128xf32>
      %182 = arith.addf %174, %181 : vector<8x128xf32>
      %183 = vector.broadcast %10 : f32 to vector<8x128xf32>
      %184 = arith.mulf %101, %183 : vector<8x128xf32>
      %185 = vector.broadcast %42 : f32 to vector<8x128xf32>
      %186 = arith.addf %184, %185 : vector<8x128xf32>
      %187 = math.tanh %186 : vector<8x128xf32>
      %188 = vector.broadcast %74 : f32 to vector<8x128xf32>
      %189 = arith.mulf %187, %188 : vector<8x128xf32>
      %190 = arith.addf %182, %189 : vector<8x128xf32>
      %191 = vector.broadcast %11 : f32 to vector<8x128xf32>
      %192 = arith.mulf %101, %191 : vector<8x128xf32>
      %193 = vector.broadcast %43 : f32 to vector<8x128xf32>
      %194 = arith.addf %192, %193 : vector<8x128xf32>
      %195 = math.tanh %194 : vector<8x128xf32>
      %196 = vector.broadcast %75 : f32 to vector<8x128xf32>
      %197 = arith.mulf %195, %196 : vector<8x128xf32>
      %198 = arith.addf %190, %197 : vector<8x128xf32>
      %199 = vector.broadcast %12 : f32 to vector<8x128xf32>
      %200 = arith.mulf %101, %199 : vector<8x128xf32>
      %201 = vector.broadcast %44 : f32 to vector<8x128xf32>
      %202 = arith.addf %200, %201 : vector<8x128xf32>
      %203 = math.tanh %202 : vector<8x128xf32>
      %204 = vector.broadcast %76 : f32 to vector<8x128xf32>
      %205 = arith.mulf %203, %204 : vector<8x128xf32>
      %206 = arith.addf %198, %205 : vector<8x128xf32>
      %207 = vector.broadcast %13 : f32 to vector<8x128xf32>
      %208 = arith.mulf %101, %207 : vector<8x128xf32>
      %209 = vector.broadcast %45 : f32 to vector<8x128xf32>
      %210 = arith.addf %208, %209 : vector<8x128xf32>
      %211 = math.tanh %210 : vector<8x128xf32>
      %212 = vector.broadcast %77 : f32 to vector<8x128xf32>
      %213 = arith.mulf %211, %212 : vector<8x128xf32>
      %214 = arith.addf %206, %213 : vector<8x128xf32>
      %215 = vector.broadcast %14 : f32 to vector<8x128xf32>
      %216 = arith.mulf %101, %215 : vector<8x128xf32>
      %217 = vector.broadcast %46 : f32 to vector<8x128xf32>
      %218 = arith.addf %216, %217 : vector<8x128xf32>
      %219 = math.tanh %218 : vector<8x128xf32>
      %220 = vector.broadcast %78 : f32 to vector<8x128xf32>
      %221 = arith.mulf %219, %220 : vector<8x128xf32>
      %222 = arith.addf %214, %221 : vector<8x128xf32>
      %223 = vector.broadcast %15 : f32 to vector<8x128xf32>
      %224 = arith.mulf %101, %223 : vector<8x128xf32>
      %225 = vector.broadcast %47 : f32 to vector<8x128xf32>
      %226 = arith.addf %224, %225 : vector<8x128xf32>
      %227 = math.tanh %226 : vector<8x128xf32>
      %228 = vector.broadcast %79 : f32 to vector<8x128xf32>
      %229 = arith.mulf %227, %228 : vector<8x128xf32>
      %230 = arith.addf %222, %229 : vector<8x128xf32>
      %231 = vector.broadcast %16 : f32 to vector<8x128xf32>
      %232 = arith.mulf %101, %231 : vector<8x128xf32>
      %233 = vector.broadcast %48 : f32 to vector<8x128xf32>
      %234 = arith.addf %232, %233 : vector<8x128xf32>
      %235 = math.tanh %234 : vector<8x128xf32>
      %236 = vector.broadcast %80 : f32 to vector<8x128xf32>
      %237 = arith.mulf %235, %236 : vector<8x128xf32>
      %238 = arith.addf %230, %237 : vector<8x128xf32>
      %239 = vector.broadcast %17 : f32 to vector<8x128xf32>
      %240 = arith.mulf %101, %239 : vector<8x128xf32>
      %241 = vector.broadcast %49 : f32 to vector<8x128xf32>
      %242 = arith.addf %240, %241 : vector<8x128xf32>
      %243 = math.tanh %242 : vector<8x128xf32>
      %244 = vector.broadcast %81 : f32 to vector<8x128xf32>
      %245 = arith.mulf %243, %244 : vector<8x128xf32>
      %246 = arith.addf %238, %245 : vector<8x128xf32>
      %247 = vector.broadcast %18 : f32 to vector<8x128xf32>
      %248 = arith.mulf %101, %247 : vector<8x128xf32>
      %249 = vector.broadcast %50 : f32 to vector<8x128xf32>
      %250 = arith.addf %248, %249 : vector<8x128xf32>
      %251 = math.tanh %250 : vector<8x128xf32>
      %252 = vector.broadcast %82 : f32 to vector<8x128xf32>
      %253 = arith.mulf %251, %252 : vector<8x128xf32>
      %254 = arith.addf %246, %253 : vector<8x128xf32>
      %255 = vector.broadcast %19 : f32 to vector<8x128xf32>
      %256 = arith.mulf %101, %255 : vector<8x128xf32>
      %257 = vector.broadcast %51 : f32 to vector<8x128xf32>
      %258 = arith.addf %256, %257 : vector<8x128xf32>
      %259 = math.tanh %258 : vector<8x128xf32>
      %260 = vector.broadcast %83 : f32 to vector<8x128xf32>
      %261 = arith.mulf %259, %260 : vector<8x128xf32>
      %262 = arith.addf %254, %261 : vector<8x128xf32>
      %263 = vector.broadcast %20 : f32 to vector<8x128xf32>
      %264 = arith.mulf %101, %263 : vector<8x128xf32>
      %265 = vector.broadcast %52 : f32 to vector<8x128xf32>
      %266 = arith.addf %264, %265 : vector<8x128xf32>
      %267 = math.tanh %266 : vector<8x128xf32>
      %268 = vector.broadcast %84 : f32 to vector<8x128xf32>
      %269 = arith.mulf %267, %268 : vector<8x128xf32>
      %270 = arith.addf %262, %269 : vector<8x128xf32>
      %271 = vector.broadcast %21 : f32 to vector<8x128xf32>
      %272 = arith.mulf %101, %271 : vector<8x128xf32>
      %273 = vector.broadcast %53 : f32 to vector<8x128xf32>
      %274 = arith.addf %272, %273 : vector<8x128xf32>
      %275 = math.tanh %274 : vector<8x128xf32>
      %276 = vector.broadcast %85 : f32 to vector<8x128xf32>
      %277 = arith.mulf %275, %276 : vector<8x128xf32>
      %278 = arith.addf %270, %277 : vector<8x128xf32>
      %279 = vector.broadcast %22 : f32 to vector<8x128xf32>
      %280 = arith.mulf %101, %279 : vector<8x128xf32>
      %281 = vector.broadcast %54 : f32 to vector<8x128xf32>
      %282 = arith.addf %280, %281 : vector<8x128xf32>
      %283 = math.tanh %282 : vector<8x128xf32>
      %284 = vector.broadcast %86 : f32 to vector<8x128xf32>
      %285 = arith.mulf %283, %284 : vector<8x128xf32>
      %286 = arith.addf %278, %285 : vector<8x128xf32>
      %287 = vector.broadcast %23 : f32 to vector<8x128xf32>
      %288 = arith.mulf %101, %287 : vector<8x128xf32>
      %289 = vector.broadcast %55 : f32 to vector<8x128xf32>
      %290 = arith.addf %288, %289 : vector<8x128xf32>
      %291 = math.tanh %290 : vector<8x128xf32>
      %292 = vector.broadcast %87 : f32 to vector<8x128xf32>
      %293 = arith.mulf %291, %292 : vector<8x128xf32>
      %294 = arith.addf %286, %293 : vector<8x128xf32>
      %295 = vector.broadcast %24 : f32 to vector<8x128xf32>
      %296 = arith.mulf %101, %295 : vector<8x128xf32>
      %297 = vector.broadcast %56 : f32 to vector<8x128xf32>
      %298 = arith.addf %296, %297 : vector<8x128xf32>
      %299 = math.tanh %298 : vector<8x128xf32>
      %300 = vector.broadcast %88 : f32 to vector<8x128xf32>
      %301 = arith.mulf %299, %300 : vector<8x128xf32>
      %302 = arith.addf %294, %301 : vector<8x128xf32>
      %303 = vector.broadcast %25 : f32 to vector<8x128xf32>
      %304 = arith.mulf %101, %303 : vector<8x128xf32>
      %305 = vector.broadcast %57 : f32 to vector<8x128xf32>
      %306 = arith.addf %304, %305 : vector<8x128xf32>
      %307 = math.tanh %306 : vector<8x128xf32>
      %308 = vector.broadcast %89 : f32 to vector<8x128xf32>
      %309 = arith.mulf %307, %308 : vector<8x128xf32>
      %310 = arith.addf %302, %309 : vector<8x128xf32>
      %311 = vector.broadcast %26 : f32 to vector<8x128xf32>
      %312 = arith.mulf %101, %311 : vector<8x128xf32>
      %313 = vector.broadcast %58 : f32 to vector<8x128xf32>
      %314 = arith.addf %312, %313 : vector<8x128xf32>
      %315 = math.tanh %314 : vector<8x128xf32>
      %316 = vector.broadcast %90 : f32 to vector<8x128xf32>
      %317 = arith.mulf %315, %316 : vector<8x128xf32>
      %318 = arith.addf %310, %317 : vector<8x128xf32>
      %319 = vector.broadcast %27 : f32 to vector<8x128xf32>
      %320 = arith.mulf %101, %319 : vector<8x128xf32>
      %321 = vector.broadcast %59 : f32 to vector<8x128xf32>
      %322 = arith.addf %320, %321 : vector<8x128xf32>
      %323 = math.tanh %322 : vector<8x128xf32>
      %324 = vector.broadcast %91 : f32 to vector<8x128xf32>
      %325 = arith.mulf %323, %324 : vector<8x128xf32>
      %326 = arith.addf %318, %325 : vector<8x128xf32>
      %327 = vector.broadcast %28 : f32 to vector<8x128xf32>
      %328 = arith.mulf %101, %327 : vector<8x128xf32>
      %329 = vector.broadcast %60 : f32 to vector<8x128xf32>
      %330 = arith.addf %328, %329 : vector<8x128xf32>
      %331 = math.tanh %330 : vector<8x128xf32>
      %332 = vector.broadcast %92 : f32 to vector<8x128xf32>
      %333 = arith.mulf %331, %332 : vector<8x128xf32>
      %334 = arith.addf %326, %333 : vector<8x128xf32>
      %335 = vector.broadcast %29 : f32 to vector<8x128xf32>
      %336 = arith.mulf %101, %335 : vector<8x128xf32>
      %337 = vector.broadcast %61 : f32 to vector<8x128xf32>
      %338 = arith.addf %336, %337 : vector<8x128xf32>
      %339 = math.tanh %338 : vector<8x128xf32>
      %340 = vector.broadcast %93 : f32 to vector<8x128xf32>
      %341 = arith.mulf %339, %340 : vector<8x128xf32>
      %342 = arith.addf %334, %341 : vector<8x128xf32>
      %343 = vector.broadcast %30 : f32 to vector<8x128xf32>
      %344 = arith.mulf %101, %343 : vector<8x128xf32>
      %345 = vector.broadcast %62 : f32 to vector<8x128xf32>
      %346 = arith.addf %344, %345 : vector<8x128xf32>
      %347 = math.tanh %346 : vector<8x128xf32>
      %348 = vector.broadcast %94 : f32 to vector<8x128xf32>
      %349 = arith.mulf %347, %348 : vector<8x128xf32>
      %350 = arith.addf %342, %349 : vector<8x128xf32>
      %351 = vector.broadcast %31 : f32 to vector<8x128xf32>
      %352 = arith.mulf %101, %351 : vector<8x128xf32>
      %353 = vector.broadcast %63 : f32 to vector<8x128xf32>
      %354 = arith.addf %352, %353 : vector<8x128xf32>
      %355 = math.tanh %354 : vector<8x128xf32>
      %356 = vector.broadcast %95 : f32 to vector<8x128xf32>
      %357 = arith.mulf %355, %356 : vector<8x128xf32>
      %358 = arith.addf %350, %357 : vector<8x128xf32>
      %359 = arith.index_cast %99 : i32 to index
      %c0_67 = arith.constant 0 : index
      %360 = vector.load %arg6[%359, %c0_67] : memref<16x128xf32, #tpu.memory_space<vmem>>, vector<8x128xf32>
      tpu.vector_store %arg6[%359, %c0_67], %358 {strides = array<i32>} : memref<16x128xf32, #tpu.memory_space<vmem>>, vector<8x128xf32>,
    }
    %c2_i32_65 = arith.constant 2 : i32
    return
  }
  func.func @transform_0(%arg0: i32) -> (i32, i32) {
    %c0_i32 = arith.constant 0 : i32
    %c0_i32_0 = arith.constant 0 : i32
    return %arg0, %c0_i32 : i32, i32
  }
  func.func @transform_1(%arg0: i32) -> i32 {
    %c0_i32 = arith.constant 0 : i32
    %c0_i32_0 = arith.constant 0 : i32
    return %c0_i32 : i32
  }
  func.func @transform_2(%arg0: i32) -> i32 {
    %c0_i32 = arith.constant 0 : i32
    %c0_i32_0 = arith.constant 0 : i32
    return %c0_i32 : i32
  }
  func.func @transform_3(%arg0: i32) -> i32 {
    %c0_i32 = arith.constant 0 : i32
    %c0_i32_0 = arith.constant 0 : i32
    return %c0_i32 : i32
  }
  func.func @transform_4(%arg0: i32) -> i32 {
    %c0_i32 = arith.constant 0 : i32
    %c0_i32_0 = arith.constant 0 : i32
    return %c0_i32 : i32
  }
  func.func @transform_5(%arg0: i32) -> (i32, i32) {
    %c0_i32 = arith.constant 0 : i32
    %c0_i32_0 = arith.constant 0 : i32
    return %arg0, %c0_i32 : i32, i32
  }
}

</mosaic_0001>

<llo_original>
// kernel: tpu_custom_call.1
$region0: #{tpu_custom_call.1}
  #allocation0 [shape = 'u32[]', space=smem, size = 0x4, offset = 0x4, fixed_abs, tag = 'smem constant byte address 0x4 - core index']
  #allocation1 [shape = 'u32[144,128]{1,0:T(1,128)}', space=vmem, size = 0x12000, scoped, tag = 'internal scratch']
  #allocation2 [shape = 'f32[1]{0:T(128)S(6)}', space=smem, size = 0x200, scoped, tag = 'scoped memory for tpu_custom_call.1']
  %s0 = inlined_call_operand.hbm [shape: f32[32,128], index: 0, kind: input, shape index: {}]
  %s1 = inlined_call_operand.vmem [shape: f32[32], index: 1, kind: input, shape index: {}]
  %s2 = inlined_call_operand.vmem [shape: f32[32], index: 2, kind: input, shape index: {}]
  %s3 = inlined_call_operand.vmem [shape: f32[32], index: 3, kind: input, shape index: {}]
  %s4 = inlined_call_operand.<no memory space> [shape: f32[1], index: 4, kind: input, shape index: {}]
  %s5 = inlined_call_operand.hbm [shape: f32[32,128], index: 5, kind: output, shape index: {}]
  %s6 = sld [smem:[#allocation0]]
  $region76: #{tpu_custom_call.1} parent=0
    _
  %s8 = ssub.s32 1, %s6
  %s9 = scalar_select 0, %s8, %s6
  %10 = sst [smem:[#allocation2]] %s4
  $region1: #{tpu_custom_call.1} parent=0
    #allocation3 [shape = 'u8[16384]{0}', space=vmem, size = 0x4000, scoped, tag = 'input window, operand 0']
    #allocation4 [shape = 's32[2]{0}', space=sflag, size = 0x8, scoped, tag = 'scoped memory for tpu_custom_call.1']
    #allocation5 [shape = 's32[2]{0}', space=sflag, size = 0x8, scoped, tag = 'scoped memory for tpu_custom_call.1']
    #allocation6 [shape = 's32[2]{0}', space=sflag, size = 0x8, scoped, tag = 'scoped memory for tpu_custom_call.1']
    #allocation7 [shape = 'u8[512]{0}', space=smem, size = 0x200, scoped, tag = 'input window, operand 1, single buffered']
    #allocation8 [shape = 'u8[512]{0}', space=smem, size = 0x200, scoped, tag = 'input window, operand 2, single buffered']
    #allocation9 [shape = 's32[1]{0}', space=sflag, size = 0x4, scoped, tag = 'scoped memory for tpu_custom_call.1']
    #allocation10 [shape = 'u8[512]{0}', space=smem, size = 0x200, scoped, tag = 'input window, operand 3, single buffered']
    #allocation11 [shape = 'u8[16384]{0}', space=vmem, size = 0x4000, scoped, tag = 'output window, operand 0']
    %11 = vsyncpa [#allocation4], 0
    %s12 = scalar_lea.sflag [#allocation4], 1
    %13 = vsyncpa %s12, 0
    %14 = vsyncpa [#allocation6], 0
    %15 = vsyncpa [#allocation9], 0
    %16 = vsyncpa [#allocation5], 0
    %s17 = scalar_lea.sflag [#allocation5], 1
    %18 = vsyncpa %s17, 0
    loop: start=0, step=1, limit=4
    $region2: #{tpu_custom_call.1} parent=1 // loop_pre_header
      _
    $region3: #{tpu_custom_call.1} parent=1 // loop_header
      %s20 = sphi 0, %s24
      %p21 = scmp.ge.s32.totalorder %s20, 4
      %s30 = sphi 0, %s32
      %s33 = sphi 0, %s30
      %s34 = sphi 0, %s33
      %s50 = sphi 0, %s34
      %s54 = sphi 0, %s54
      %s56 = sphi 0, %s54
      %s57 = sphi 0, %s56
      %s71 = sphi 0, %s57
      %s75 = sphi 0, %s75
      %s77 = sphi 0, %s75
      %s78 = sphi 0, %s77
      %s92 = sphi 0, %s78
      %s96 = sphi 0, %s96
      %s98 = sphi 0, %s96
      %s99 = sphi 0, %s98
      %s113 = sphi 0, %s99
      %s117 = sphi 0, %s117
      %s119 = sphi 0, %s117
      %s120 = sphi 0, %s119
      %s134 = sphi 0, %s120
      %s140 = sphi 0, %s142
      %s143 = sphi 0, %s140
      %s144 = sphi 0, %s143
      %s160 = sphi 0, %s144
    $region4: #{tpu_custom_call.1} parent=1 // loop_header_branch
      %23 = sbr.rel (%p21) target = $region8
    $region5: #{tpu_custom_call.1} parent=1 // loop_body
      %s25 = ssub.s32 %s20, 1
      %s26 = ssub.s32 %s20, 2
      %s27 = sadd.s32 %s20, 1
      %s28 = ssub.s32 %s20, %s27
      %p29 = scmp.eq.s32.totalorder %s28, 0
      %s31 = sadd.s32 %s30, 1
      %s32 = scalar_select %p29, %s30, %s31
      %p35 = pneg %p29
      %p36 = scmp.eq.s32.totalorder %s20, 1
      %p37 = por %p35, %p36
      %p38 = scmp.ne.s32.totalorder %s30, %s33
      %p39 = scmp.eq.s32.totalorder %s20, 0
      %p40 = por %p38, %p39
      %p41 = scmp.ne.s32.totalorder %s30, %s33
      %p42 = scmp.eq.s32.totalorder %s25, 1
      %p43 = por %p41, %p42
      %p44 = scmp.ne.s32.totalorder %s33, %s34
      %p45 = scmp.eq.s32.totalorder %s25, 0
      %p46 = por %p44, %p45
      %p47 = scmp.ne.s32.totalorder %s33, %s34
      %p48 = scmp.eq.s32.totalorder %s26, 1
      %p49 = por %p47, %p48
      %p51 = scmp.ne.s32.totalorder %s34, %s50
      %p52 = scmp.eq.s32.totalorder %s26, 0
      %p53 = por %p51, %p52
      %s55 = sadd.s32 %s54, 1
      %p58 = scmp.eq.s32.totalorder %s20, 1
      %p59 = scmp.ne.s32.totalorder %s54, %s56
      %p60 = scmp.eq.s32.totalorder %s20, 0
      %p61 = por %p59, %p60
      %p62 = scmp.ne.s32.totalorder %s54, %s56
      %p63 = scmp.eq.s32.totalorder %s25, 1
      %p64 = por %p62, %p63
      %p65 = scmp.ne.s32.totalorder %s56, %s57
      %p66 = scmp.eq.s32.totalorder %s25, 0
      %p67 = por %p65, %p66
      %p68 = scmp.ne.s32.totalorder %s56, %s57
      %p69 = scmp.eq.s32.totalorder %s26, 1
      %p70 = por %p68, %p69
      %p72 = scmp.ne.s32.totalorder %s57, %s71
      %p73 = scmp.eq.s32.totalorder %s26, 0
      %p74 = por %p72, %p73
      %s76 = sadd.s32 %s75, 1
      %p79 = scmp.eq.s32.totalorder %s20, 1
      %p80 = scmp.ne.s32.totalorder %s75, %s77
      %p81 = scmp.eq.s32.totalorder %s20, 0
      %p82 = por %p80, %p81
      %p83 = scmp.ne.s32.totalorder %s75, %s77
      %p84 = scmp.eq.s32.totalorder %s25, 1
      %p85 = por %p83, %p84
      %p86 = scmp.ne.s32.totalorder %s77, %s78
      %p87 = scmp.eq.s32.totalorder %s25, 0
      %p88 = por %p86, %p87
      %p89 = scmp.ne.s32.totalorder %s77, %s78
      %p90 = scmp.eq.s32.totalorder %s26, 1
      %p91 = por %p89, %p90
      %p93 = scmp.ne.s32.totalorder %s78, %s92
      %p94 = scmp.eq.s32.totalorder %s26, 0
      %p95 = por %p93, %p94
      %s97 = sadd.s32 %s96, 1
      %p100 = scmp.eq.s32.totalorder %s20, 1
      %p101 = scmp.ne.s32.totalorder %s96, %s98
      %p102 = scmp.eq.s32.totalorder %s20, 0
      %p103 = por %p101, %p102
      %p104 = scmp.ne.s32.totalorder %s96, %s98
      %p105 = scmp.eq.s32.totalorder %s25, 1
      %p106 = por %p104, %p105
      %p107 = scmp.ne.s32.totalorder %s98, %s99
      %p108 = scmp.eq.s32.totalorder %s25, 0
      %p109 = por %p107, %p108
      %p110 = scmp.ne.s32.totalorder %s98, %s99
      %p111 = scmp.eq.s32.totalorder %s26, 1
      %p112 = por %p110, %p111
      %p114 = scmp.ne.s32.totalorder %s99, %s113
      %p115 = scmp.eq.s32.totalorder %s26, 0
      %p116 = por %p114, %p115
      %s118 = sadd.s32 %s117, 1
      %p121 = scmp.eq.s32.totalorder %s20, 1
      %p122 = scmp.ne.s32.totalorder %s117, %s119
      %p123 = scmp.eq.s32.totalorder %s20, 0
      %p124 = por %p122, %p123
      %p125 = scmp.ne.s32.totalorder %s117, %s119
      %p126 = scmp.eq.s32.totalorder %s25, 1
      %p127 = por %p125, %p126
      %p128 = scmp.ne.s32.totalorder %s119, %s120
      %p129 = scmp.eq.s32.totalorder %s25, 0
      %p130 = por %p128, %p129
      %p131 = scmp.ne.s32.totalorder %s119, %s120
      %p132 = scmp.eq.s32.totalorder %s26, 1
      %p133 = por %p131, %p132
      %p135 = scmp.ne.s32.totalorder %s120, %s134
      %p136 = scmp.eq.s32.totalorder %s26, 0
      %p137 = por %p135, %p136
      %s138 = ssub.s32 %s20, %s27
      %p139 = scmp.eq.s32.totalorder %s138, 0
      %s141 = sadd.s32 %s140, 1
      %s142 = scalar_select %p139, %s140, %s141
      %p145 = pneg %p139
      %p146 = scmp.eq.s32.totalorder %s20, 1
      %p147 = por %p145, %p146
      %p148 = scmp.ne.s32.totalorder %s140, %s143
      %p149 = scmp.eq.s32.totalorder %s20, 0
      %p150 = por %p148, %p149
      %p151 = scmp.ne.s32.totalorder %s140, %s143
      %p152 = scmp.eq.s32.totalorder %s25, 1
      %p153 = por %p151, %p152
      %p154 = scmp.ne.s32.totalorder %s143, %s144
      %p155 = scmp.eq.s32.totalorder %s25, 0
      %p156 = por %p154, %p155
      %p157 = scmp.ne.s32.totalorder %s143, %s144
      %p158 = scmp.eq.s32.totalorder %s26, 1
      %p159 = por %p157, %p158
      %p161 = scmp.ne.s32.totalorder %s144, %s160
      %p162 = scmp.eq.s32.totalorder %s26, 0
      %p163 = por %p161, %p162
      %p164 = scmp.le.s32.totalorder 1, %s20
      %p165 = scmp.lt.s32.totalorder %s20, 3
      %p166 = pnand %p164, %p165
      %p167 = pneg %p166
      // Predicated region
      $region9: #{tpu_custom_call.1} parent=5 // pred_check
        _
      $region10: #{tpu_custom_call.1} parent=5 // pred_check_branch
        %169 = sbr.rel (%p166) target = $region12
      $region11: #{tpu_custom_call.1} parent=5 // pred_region
        %s170 = ssub.s32 %s20, 1
        // Predicated region
        $region13: #{tpu_custom_call.1} parent=11 // pred_check
          %p171 = pneg %p67
        $region14: #{tpu_custom_call.1} parent=11 // pred_check_branch
          %173 = sbr.rel (%p171) target = $region16
        $region15: #{tpu_custom_call.1} parent=11 // pred_region
          %s175 = ssub.s32 16, 16
          %176 = vsyncadd [#allocation6], %s175
          %s178 = sshll.u32 %s1, 4
          %s179 = int_to_ptr.vmem [resolvable:$true] %s178
          %181 = dma.vmem_to_smem %s179, 16, [#allocation7], [#allocation6]
        $region16: #{tpu_custom_call.1} parent=11 // pred_fallthru
          _
        // Predicated region
        $region17: #{tpu_custom_call.1} parent=11 // pred_check
          %p182 = pneg %p88
        $region18: #{tpu_custom_call.1} parent=11 // pred_check_branch
          %184 = sbr.rel (%p182) target = $region20
        $region19: #{tpu_custom_call.1} parent=11 // pred_region
          %s186 = ssub.s32 16, 16
          %187 = vsyncadd [#allocation9], %s186
          %s189 = sshll.u32 %s2, 4
          %s190 = int_to_ptr.vmem [resolvable:$true] %s189
          %192 = dma.vmem_to_smem %s190, 16, [#allocation8], [#allocation9]
        $region20: #{tpu_custom_call.1} parent=11 // pred_fallthru
          _
        // Predicated region
        $region21: #{tpu_custom_call.1} parent=11 // pred_check
          %p193 = pneg %p109
        $region22: #{tpu_custom_call.1} parent=11 // pred_check_branch
          %195 = sbr.rel (%p193) target = $region24
        $region23: #{tpu_custom_call.1} parent=11 // pred_region
          %s197 = ssub.s32 16, 16
          %198 = vsyncadd [#allocation9], %s197
          %s200 = sshll.u32 %s3, 4
          %s201 = int_to_ptr.vmem [resolvable:$true] %s200
          %203 = dma.vmem_to_smem %s201, 16, [#allocation10], [#allocation9]
        $region24: #{tpu_custom_call.1} parent=11 // pred_fallthru
          _
        // Predicated region
        $region25: #{tpu_custom_call.1} parent=11 // pred_check
          %p204 = pneg %p130
        $region26: #{tpu_custom_call.1} parent=11 // pred_check_branch
          %206 = sbr.rel (%p204) target = $region28
        $region27: #{tpu_custom_call.1} parent=11 // pred_region
          _
        $region28: #{tpu_custom_call.1} parent=11 // pred_fallthru
          _
      $region12: #{tpu_custom_call.1} parent=5 // pred_fallthru
        _
      %p207 = scmp.lt.s32.totalorder %s20, 2
      // Predicated region
      $region29: #{tpu_custom_call.1} parent=5 // pred_check
        %p208 = pneg %p207
      $region30: #{tpu_custom_call.1} parent=5 // pred_check_branch
        %210 = sbr.rel (%p208) target = $region32
      $region31: #{tpu_custom_call.1} parent=5 // pred_region
        // Predicated region
        $region33: #{tpu_custom_call.1} parent=31 // pred_check
          %p211 = pneg %p40
        $region34: #{tpu_custom_call.1} parent=31 // pred_check_branch
          %213 = sbr.rel (%p211) target = $region36
        $region35: #{tpu_custom_call.1} parent=31 // pred_region
          %s214 = sand.u32 %s30, 1
          %s215 = scalar_lea.sflag [#allocation4], %s214
          %s216 = sand.u32 %s30, 1
          %s217 = smul.addr %s216, 16
          %s218 = scalar_lea.vmem [#allocation3], %s217
          %s219 = smul.u32 2, %s20
          %s221 = ssub.s32 256, 256
          %222 = vsyncadd %s215, %s221
          %s223 = smul.addr %s219, 128
          %s224 = scalar_lea.hbm %s0, %s223
          %s225 = sshll.u32 %s218, 4
          %s226 = int_to_ptr.vmem [resolvable:$true] %s225
          %231 = dma.hbm_to_vmem [thread:$0]  %s224, 256, %s226, %s215, 128, 128, 8
        $region36: #{tpu_custom_call.1} parent=31 // pred_fallthru
          _
      $region32: #{tpu_custom_call.1} parent=5 // pred_fallthru
        _
      %p232 = scmp.le.s32.totalorder 1, %s20
      %p233 = scmp.lt.s32.totalorder %s20, 3
      %p234 = pnand %p232, %p233
      %p235 = pneg %p234
      // Predicated region
      $region37: #{tpu_custom_call.1} parent=5 // pred_check
        _
      $region38: #{tpu_custom_call.1} parent=5 // pred_check_branch
        %237 = sbr.rel (%p234) target = $region40
      $region39: #{tpu_custom_call.1} parent=5 // pred_region
        %s238 = ssub.s32 %s20, 1
        %s239 = sand.u32 %s33, 1
        %s240 = scalar_lea.sflag [#allocation4], %s239
        %s241 = sand.u32 %s33, 1
        %s242 = smul.addr %s241, 16
        %s243 = scalar_lea.vmem [#allocation3], %s242
        // Predicated region
        $region41: #{tpu_custom_call.1} parent=39 // pred_check
          %p244 = pneg %p46
        $region42: #{tpu_custom_call.1} parent=39 // pred_check_branch
          %246 = sbr.rel (%p244) target = $region44
        $region43: #{tpu_custom_call.1} parent=39 // pred_region
          %247 = dma.done %s240, 256
        $region44: #{tpu_custom_call.1} parent=39 // pred_fallthru
          _
        // Predicated region
        $region45: #{tpu_custom_call.1} parent=39 // pred_check
          %p248 = pneg %p67
        $region46: #{tpu_custom_call.1} parent=39 // pred_check_branch
          %250 = sbr.rel (%p248) target = $region48
        $region47: #{tpu_custom_call.1} parent=39 // pred_region
          %251 = dma.done [#allocation6], 16
        $region48: #{tpu_custom_call.1} parent=39 // pred_fallthru
          _
        // Predicated region
        $region49: #{tpu_custom_call.1} parent=39 // pred_check
          %p252 = pneg %p88
        $region50: #{tpu_custom_call.1} parent=39 // pred_check_branch
          %254 = sbr.rel (%p252) target = $region52
        $region51: #{tpu_custom_call.1} parent=39 // pred_region
          %255 = dma.done [#allocation9], 16
        $region52: #{tpu_custom_call.1} parent=39 // pred_fallthru
          _
        // Predicated region
        $region53: #{tpu_custom_call.1} parent=39 // pred_check
          %p256 = pneg %p109
        $region54: #{tpu_custom_call.1} parent=39 // pred_check_branch
          %258 = sbr.rel (%p256) target = $region56
        $region55: #{tpu_custom_call.1} parent=39 // pred_region
          %259 = dma.done [#allocation9], 16
        $region56: #{tpu_custom_call.1} parent=39 // pred_fallthru
          _
        %260 = sfence
        %s261 = sand.u32 %s33, 1
        %s262 = scalar_lea.sflag [#allocation4], %s261
        %s263 = sand.u32 %s33, 1
        %s264 = smul.addr %s263, 16
        %s265 = scalar_lea.vmem [#allocation3], %s264
        %p266 = pneg %p46
        %p267 = pneg %p43
        %p268 = pneg %p67
        %p269 = pneg %p64
        %p270 = pneg %p88
        %p271 = pneg %p85
        %p272 = pneg %p109
        %p273 = pneg %p106
        %p274 = pneg %p130
        %p275 = pneg %p127
        %p276 = pneg %p156
        %p277 = pneg %p153
        %s278 = sand.u32 %s143, 1
        %s279 = scalar_lea.sflag [#allocation5], %s278
        %s280 = sand.u32 %s143, 1
        %s281 = smul.addr %s280, 16
        %s282 = scalar_lea.vmem [#allocation11], %s281
        %s283 = smul.u32 2, %s25
        %s284 = smul.u32 2, %s25
        %s285 = sld [smem:[#allocation7]]
        %s286 = sld [smem:[#allocation7 + $0x1]]
        %s287 = sld [smem:[#allocation7 + $0x2]]
        %s288 = sld [smem:[#allocation7 + $0x3]]
        %s289 = sld [smem:[#allocation7 + $0x4]]
        %s290 = sld [smem:[#allocation7 + $0x5]]
        %s291 = sld [smem:[#allocation7 + $0x6]]
        %s292 = sld [smem:[#allocation7 + $0x7]]
        %s293 = sld [smem:[#allocation7 + $0x8]]
        %s294 = sld [smem:[#allocation7 + $0x9]]
        %s295 = sld [smem:[#allocation7 + $0xa]]
        %s296 = sld [smem:[#allocation7 + $0xb]]
        %s297 = sld [smem:[#allocation7 + $0xc]]
        %s298 = sld [smem:[#allocation7 + $0xd]]
        %s299 = sld [smem:[#allocation7 + $0xe]]
        %s300 = sld [smem:[#allocation7 + $0xf]]
        %s301 = sld [smem:[#allocation7 + $0x10]]
        %s302 = sld [smem:[#allocation7 + $0x11]]
        %s303 = sld [smem:[#allocation7 + $0x12]]
        %s304 = sld [smem:[#allocation7 + $0x13]]
        %s305 = sld [smem:[#allocation7 + $0x14]]
        %s306 = sld [smem:[#allocation7 + $0x15]]
        %s307 = sld [smem:[#allocation7 + $0x16]]
        %s308 = sld [smem:[#allocation7 + $0x17]]
        %s309 = sld [smem:[#allocation7 + $0x18]]
        %s310 = sld [smem:[#allocation7 + $0x19]]
        %s311 = sld [smem:[#allocation7 + $0x1a]]
        %s312 = sld [smem:[#allocation7 + $0x1b]]
        %s313 = sld [smem:[#allocation7 + $0x1c]]
        %s314 = sld [smem:[#allocation7 + $0x1d]]
        %s315 = sld [smem:[#allocation7 + $0x1e]]
        %s316 = sld [smem:[#allocation7 + $0x1f]]
        %s317 = sld [smem:[#allocation8]]
        %s318 = sld [smem:[#allocation8 + $0x1]]
        %s319 = sld [smem:[#allocation8 + $0x2]]
        %s320 = sld [smem:[#allocation8 + $0x3]]
        %s321 = sld [smem:[#allocation8 + $0x4]]
        %s322 = sld [smem:[#allocation8 + $0x5]]
        %s323 = sld [smem:[#allocation8 + $0x6]]
        %s324 = sld [smem:[#allocation8 + $0x7]]
        %s325 = sld [smem:[#allocation8 + $0x8]]
        %s326 = sld [smem:[#allocation8 + $0x9]]
        %s327 = sld [smem:[#allocation8 + $0xa]]
        %s328 = sld [smem:[#allocation8 + $0xb]]
        %s329 = sld [smem:[#allocation8 + $0xc]]
        %s330 = sld [smem:[#allocation8 + $0xd]]
        %s331 = sld [smem:[#allocation8 + $0xe]]
        %s332 = sld [smem:[#allocation8 + $0xf]]
        %s333 = sld [smem:[#allocation8 + $0x10]]
        %s334 = sld [smem:[#allocation8 + $0x11]]
        %s335 = sld [smem:[#allocation8 + $0x12]]
        %s336 = sld [smem:[#allocation8 + $0x13]]
        %s337 = sld [smem:[#allocation8 + $0x14]]
        %s338 = sld [smem:[#allocation8 + $0x15]]
        %s339 = sld [smem:[#allocation8 + $0x16]]
        %s340 = sld [smem:[#allocation8 + $0x17]]
        %s341 = sld [smem:[#allocation8 + $0x18]]
        %s342 = sld [smem:[#allocation8 + $0x19]]
        %s343 = sld [smem:[#allocation8 + $0x1a]]
        %s344 = sld [smem:[#allocation8 + $0x1b]]
        %s345 = sld [smem:[#allocation8 + $0x1c]]
        %s346 = sld [smem:[#allocation8 + $0x1d]]
        %s347 = sld [smem:[#allocation8 + $0x1e]]
        %s348 = sld [smem:[#allocation8 + $0x1f]]
        %s349 = sld [smem:[#allocation10]]
        %s350 = sld [smem:[#allocation10 + $0x1]]
        %s351 = sld [smem:[#allocation10 + $0x2]]
        %s352 = sld [smem:[#allocation10 + $0x3]]
        %s353 = sld [smem:[#allocation10 + $0x4]]
        %s354 = sld [smem:[#allocation10 + $0x5]]
        %s355 = sld [smem:[#allocation10 + $0x6]]
        %s356 = sld [smem:[#allocation10 + $0x7]]
        %s357 = sld [smem:[#allocation10 + $0x8]]
        %s358 = sld [smem:[#allocation10 + $0x9]]
        %s359 = sld [smem:[#allocation10 + $0xa]]
        %s360 = sld [smem:[#allocation10 + $0xb]]
        %s361 = sld [smem:[#allocation10 + $0xc]]
        %s362 = sld [smem:[#allocation10 + $0xd]]
        %s363 = sld [smem:[#allocation10 + $0xe]]
        %s364 = sld [smem:[#allocation10 + $0xf]]
        %s365 = sld [smem:[#allocation10 + $0x10]]
        %s366 = sld [smem:[#allocation10 + $0x11]]
        %s367 = sld [smem:[#allocation10 + $0x12]]
        %s368 = sld [smem:[#allocation10 + $0x13]]
        %s369 = sld [smem:[#allocation10 + $0x14]]
        %s370 = sld [smem:[#allocation10 + $0x15]]
        %s371 = sld [smem:[#allocation10 + $0x16]]
        %s372 = sld [smem:[#allocation10 + $0x17]]
        %s373 = sld [smem:[#allocation10 + $0x18]]
        %s374 = sld [smem:[#allocation10 + $0x19]]
        %s375 = sld [smem:[#allocation10 + $0x1a]]
        %s376 = sld [smem:[#allocation10 + $0x1b]]
        %s377 = sld [smem:[#allocation10 + $0x1c]]
        %s378 = sld [smem:[#allocation10 + $0x1d]]
        %s379 = sld [smem:[#allocation10 + $0x1e]]
        %s380 = sld [smem:[#allocation10 + $0x1f]]
        %s381 = sld [smem:[#allocation2]]
        loop: start=0, step=1, limit=2
        $region57: #{tpu_custom_call.1} parent=39 // loop_pre_header
          _
        $region58: #{tpu_custom_call.1} parent=39 // loop_header
          %s383 = sphi 0, %s387
          %p384 = scmp.ge.s32.totalorder %s383, 2
        $region59: #{tpu_custom_call.1} parent=39 // loop_header_branch
          %386 = sbr.rel (%p384) target = $region63
        $region60: #{tpu_custom_call.1} parent=39 // loop_body
          %s388 = smul.u32 %s383, 8
          %s389 = scalar_lea.vmem %s243, %s388 [#allocation3]
          %v390 = vld [vmem:[%s389] sm:$0xff]
          %v391 = vstv %s381
          %v392 = vstv %s285
          %v393 = vmul.f32 %v390, %v392
          %v394 = vstv %s317
          %v395 = vadd.f32 %v393, %v394
          %v396 = vtanh.pop %v395
          %v397 = vstv %s349
          %v398 = vmul.f32 %v396, %v397
          %v399 = vadd.f32 %v391, %v398
          %v400 = vstv %s286
          %v401 = vmul.f32 %v390, %v400
          %v402 = vstv %s318
          %v403 = vadd.f32 %v401, %v402
          %v404 = vtanh.pop %v403
          %v405 = vstv %s350
          %v406 = vmul.f32 %v404, %v405
          %v407 = vadd.f32 %v399, %v406
          %v408 = vstv %s287
          %v409 = vmul.f32 %v390, %v408
          %v410 = vstv %s319
          %v411 = vadd.f32 %v409, %v410
          %v412 = vtanh.pop %v411
          %v413 = vstv %s351
          %v414 = vmul.f32 %v412, %v413
          %v415 = vadd.f32 %v407, %v414
          %v416 = vstv %s288
          %v417 = vmul.f32 %v390, %v416
          %v418 = vstv %s320
          %v419 = vadd.f32 %v417, %v418
          %v420 = vtanh.pop %v419
          %v421 = vstv %s352
          %v422 = vmul.f32 %v420, %v421
          %v423 = vadd.f32 %v415, %v422
          %v424 = vstv %s289
          %v425 = vmul.f32 %v390, %v424
          %v426 = vstv %s321
          %v427 = vadd.f32 %v425, %v426
          %v428 = vtanh.pop %v427
          %v429 = vstv %s353
          %v430 = vmul.f32 %v428, %v429
          %v431 = vadd.f32 %v423, %v430
          %v432 = vstv %s290
          %v433 = vmul.f32 %v390, %v432
          %v434 = vstv %s322
          %v435 = vadd.f32 %v433, %v434
          %v436 = vtanh.pop %v435
          %v437 = vstv %s354
          %v438 = vmul.f32 %v436, %v437
          %v439 = vadd.f32 %v431, %v438
          %v440 = vstv %s291
          %v441 = vmul.f32 %v390, %v440
          %v442 = vstv %s323
          %v443 = vadd.f32 %v441, %v442
          %v444 = vtanh.pop %v443
          %v445 = vstv %s355
          %v446 = vmul.f32 %v444, %v445
          %v447 = vadd.f32 %v439, %v446
          %v448 = vstv %s292
          %v449 = vmul.f32 %v390, %v448
          %v450 = vstv %s324
          %v451 = vadd.f32 %v449, %v450
          %v452 = vtanh.pop %v451
          %v453 = vstv %s356
          %v454 = vmul.f32 %v452, %v453
          %v455 = vadd.f32 %v447, %v454
          %v456 = vstv %s293
          %v457 = vmul.f32 %v390, %v456
          %v458 = vstv %s325
          %v459 = vadd.f32 %v457, %v458
          %v460 = vtanh.pop %v459
          %v461 = vstv %s357
          %v462 = vmul.f32 %v460, %v461
          %v463 = vadd.f32 %v455, %v462
          %v464 = vstv %s294
          %v465 = vmul.f32 %v390, %v464
          %v466 = vstv %s326
          %v467 = vadd.f32 %v465, %v466
          %v468 = vtanh.pop %v467
          %v469 = vstv %s358
          %v470 = vmul.f32 %v468, %v469
          %v471 = vadd.f32 %v463, %v470
          %v472 = vstv %s295
          %v473 = vmul.f32 %v390, %v472
          %v474 = vstv %s327
          %v475 = vadd.f32 %v473, %v474
          %v476 = vtanh.pop %v475
          %v477 = vstv %s359
          %v478 = vmul.f32 %v476, %v477
          %v479 = vadd.f32 %v471, %v478
          %v480 = vstv %s296
          %v481 = vmul.f32 %v390, %v480
          %v482 = vstv %s328
          %v483 = vadd.f32 %v481, %v482
          %v484 = vtanh.pop %v483
          %v485 = vstv %s360
          %v486 = vmul.f32 %v484, %v485
          %v487 = vadd.f32 %v479, %v486
          %v488 = vstv %s297
          %v489 = vmul.f32 %v390, %v488
          %v490 = vstv %s329
          %v491 = vadd.f32 %v489, %v490
          %v492 = vtanh.pop %v491
          %v493 = vstv %s361
          %v494 = vmul.f32 %v492, %v493
          %v495 = vadd.f32 %v487, %v494
          %v496 = vstv %s298
          %v497 = vmul.f32 %v390, %v496
          %v498 = vstv %s330
          %v499 = vadd.f32 %v497, %v498
          %v500 = vtanh.pop %v499
          %v501 = vstv %s362
          %v502 = vmul.f32 %v500, %v501
          %v503 = vadd.f32 %v495, %v502
          %v504 = vstv %s299
          %v505 = vmul.f32 %v390, %v504
          %v506 = vstv %s331
          %v507 = vadd.f32 %v505, %v506
          %v508 = vtanh.pop %v507
          %v509 = vstv %s363
          %v510 = vmul.f32 %v508, %v509
          %v511 = vadd.f32 %v503, %v510
          %v512 = vstv %s300
          %v513 = vmul.f32 %v390, %v512
          %v514 = vstv %s332
          %v515 = vadd.f32 %v513, %v514
          %v516 = vtanh.pop %v515
          %v517 = vstv %s364
          %v518 = vmul.f32 %v516, %v517
          %v519 = vadd.f32 %v511, %v518
          %v520 = vstv %s301
          %v521 = vmul.f32 %v390, %v520
          %v522 = vstv %s333
          %v523 = vadd.f32 %v521, %v522
          %v524 = vtanh.pop %v523
          %v525 = vstv %s365
          %v526 = vmul.f32 %v524, %v525
          %v527 = vadd.f32 %v519, %v526
          %v528 = vstv %s302
          %v529 = vmul.f32 %v390, %v528
          %v530 = vstv %s334
          %v531 = vadd.f32 %v529, %v530
          %v532 = vtanh.pop %v531
          %v533 = vstv %s366
          %v534 = vmul.f32 %v532, %v533
          %v535 = vadd.f32 %v527, %v534
          %v536 = vstv %s303
          %v537 = vmul.f32 %v390, %v536
          %v538 = vstv %s335
          %v539 = vadd.f32 %v537, %v538
          %v540 = vtanh.pop %v539
          %v541 = vstv %s367
          %v542 = vmul.f32 %v540, %v541
          %v543 = vadd.f32 %v535, %v542
          %v544 = vstv %s304
          %v545 = vmul.f32 %v390, %v544
          %v546 = vstv %s336
          %v547 = vadd.f32 %v545, %v546
          %v548 = vtanh.pop %v547
          %v549 = vstv %s368
          %v550 = vmul.f32 %v548, %v549
          %v551 = vadd.f32 %v543, %v550
          %v552 = vstv %s305
          %v553 = vmul.f32 %v390, %v552
          %v554 = vstv %s337
          %v555 = vadd.f32 %v553, %v554
          %v556 = vtanh.pop %v555
          %v557 = vstv %s369
          %v558 = vmul.f32 %v556, %v557
          %v559 = vadd.f32 %v551, %v558
          %v560 = vstv %s306
          %v561 = vmul.f32 %v390, %v560
          %v562 = vstv %s338
          %v563 = vadd.f32 %v561, %v562
          %v564 = vtanh.pop %v563
          %v565 = vstv %s370
          %v566 = vmul.f32 %v564, %v565
          %v567 = vadd.f32 %v559, %v566
          %v568 = vstv %s307
          %v569 = vmul.f32 %v390, %v568
          %v570 = vstv %s339
          %v571 = vadd.f32 %v569, %v570
          %v572 = vtanh.pop %v571
          %v573 = vstv %s371
          %v574 = vmul.f32 %v572, %v573
          %v575 = vadd.f32 %v567, %v574
          %v576 = vstv %s308
          %v577 = vmul.f32 %v390, %v576
          %v578 = vstv %s340
          %v579 = vadd.f32 %v577, %v578
          %v580 = vtanh.pop %v579
          %v581 = vstv %s372
          %v582 = vmul.f32 %v580, %v581
          %v583 = vadd.f32 %v575, %v582
          %v584 = vstv %s309
          %v585 = vmul.f32 %v390, %v584
          %v586 = vstv %s341
          %v587 = vadd.f32 %v585, %v586
          %v588 = vtanh.pop %v587
          %v589 = vstv %s373
          %v590 = vmul.f32 %v588, %v589
          %v591 = vadd.f32 %v583, %v590
          %v592 = vstv %s310
          %v593 = vmul.f32 %v390, %v592
          %v594 = vstv %s342
          %v595 = vadd.f32 %v593, %v594
          %v596 = vtanh.pop %v595
          %v597 = vstv %s374
          %v598 = vmul.f32 %v596, %v597
          %v599 = vadd.f32 %v591, %v598
          %v600 = vstv %s311
          %v601 = vmul.f32 %v390, %v600
          %v602 = vstv %s343
          %v603 = vadd.f32 %v601, %v602
          %v604 = vtanh.pop %v603
          %v605 = vstv %s375
          %v606 = vmul.f32 %v604, %v605
          %v607 = vadd.f32 %v599, %v606
          %v608 = vstv %s312
          %v609 = vmul.f32 %v390, %v608
          %v610 = vstv %s344
          %v611 = vadd.f32 %v609, %v610
          %v612 = vtanh.pop %v611
          %v613 = vstv %s376
          %v614 = vmul.f32 %v612, %v613
          %v615 = vadd.f32 %v607, %v614
          %v616 = vstv %s313
          %v617 = vmul.f32 %v390, %v616
          %v618 = vstv %s345
          %v619 = vadd.f32 %v617, %v618
          %v620 = vtanh.pop %v619
          %v621 = vstv %s377
          %v622 = vmul.f32 %v620, %v621
          %v623 = vadd.f32 %v615, %v622
          %v624 = vstv %s314
          %v625 = vmul.f32 %v390, %v624
          %v626 = vstv %s346
          %v627 = vadd.f32 %v625, %v626
          %v628 = vtanh.pop %v627
          %v629 = vstv %s378
          %v630 = vmul.f32 %v628, %v629
          %v631 = vadd.f32 %v623, %v630
          %v632 = vstv %s315
          %v633 = vmul.f32 %v390, %v632
          %v634 = vstv %s347
          %v635 = vadd.f32 %v633, %v634
          %v636 = vtanh.pop %v635
          %v637 = vstv %s379
          %v638 = vmul.f32 %v636, %v637
          %v639 = vadd.f32 %v631, %v638
          %v640 = vstv %s316
          %v641 = vmul.f32 %v390, %v640
          %v642 = vstv %s348
          %v643 = vadd.f32 %v641, %v642
          %v644 = vtanh.pop %v643
          %v645 = vstv %s380
          %v646 = vmul.f32 %v644, %v645
          %v647 = vadd.f32 %v639, %v646
          %s648 = scalar_lea.vmem %s282, %s388 [#allocation11]
          %649 = vst [vmem:[%s648] sm:$0xff] %v647
        $region61: #{tpu_custom_call.1} parent=39 // loop_footer
          %s387 = sadd.s32 1, %s383
        $region62: #{tpu_custom_call.1} parent=39 // loop_footer_branch
          %382 = sbr.rel target = $region58
        $region63: #{tpu_custom_call.1} parent=39 // loop_exit
          _
        %s650 = sand.u32 %s143, 1
        %s651 = scalar_lea.sflag [#allocation5], %s650
        %s652 = sand.u32 %s143, 1
        %s653 = smul.addr %s652, 16
        %s654 = scalar_lea.vmem [#allocation11], %s653
        // Predicated region
        $region64: #{tpu_custom_call.1} parent=39 // pred_check
          %p655 = pneg %p153
        $region65: #{tpu_custom_call.1} parent=39 // pred_check_branch
          %657 = sbr.rel (%p655) target = $region67
        $region66: #{tpu_custom_call.1} parent=39 // pred_region
          %s658 = smul.u32 2, %s25
          %s660 = ssub.s32 256, 256
          %661 = vsyncadd %s651, %s660
          %s662 = smul.addr %s658, 128
          %s663 = scalar_lea.hbm %s5, %s662
          %s664 = sshll.u32 %s654, 4
          %s665 = int_to_ptr.vmem [resolvable:$true] %s664
          %670 = dma.vmem_to_hbm [thread:$0]  %s665, 256, %s663, %s651, 128, 128, 8
        $region67: #{tpu_custom_call.1} parent=39 // pred_fallthru
          _
      $region40: #{tpu_custom_call.1} parent=5 // pred_fallthru
        _
      %p671 = scmp.le.s32.totalorder 2, %s20
      // Predicated region
      $region68: #{tpu_custom_call.1} parent=5 // pred_check
        %p672 = pneg %p671
      $region69: #{tpu_custom_call.1} parent=5 // pred_check_branch
        %674 = sbr.rel (%p672) target = $region71
      $region70: #{tpu_custom_call.1} parent=5 // pred_region
        %s675 = ssub.s32 %s20, 2
        // Predicated region
        $region72: #{tpu_custom_call.1} parent=70 // pred_check
          %p676 = pneg %p159
        $region73: #{tpu_custom_call.1} parent=70 // pred_check_branch
          %678 = sbr.rel (%p676) target = $region75
        $region74: #{tpu_custom_call.1} parent=70 // pred_region
          %s679 = sand.u32 %s144, 1
          %s680 = scalar_lea.sflag [#allocation5], %s679
          %s681 = sand.u32 %s144, 1
          %s682 = smul.addr %s681, 16
          %s683 = scalar_lea.vmem [#allocation11], %s682
          %684 = dma.done %s680, 256
        $region75: #{tpu_custom_call.1} parent=70 // pred_fallthru
          _
      $region71: #{tpu_custom_call.1} parent=5 // pred_fallthru
        _
    $region6: #{tpu_custom_call.1} parent=1 // loop_footer
      %s24 = sadd.s32 1, %s20
    $region7: #{tpu_custom_call.1} parent=1 // loop_footer_branch
      %19 = sbr.rel target = $region3
    $region8: #{tpu_custom_call.1} parent=1 // loop_exit
      _
    %685 = vsyncpa [#allocation4], 1
    %s686 = scalar_lea.sflag [#allocation4], 1
    %687 = vsyncpa %s686, 1
    %688 = vsyncpa [#allocation5], 1
    %s689 = scalar_lea.sflag [#allocation5], 1
    %690 = vsyncpa %s689, 1
    %691 = vsyncpa [#allocation6], 1
    %s692 = scalar_lea.sflag [#allocation6], 1
    %693 = vsyncpa %s692, 1
    %694 = vsyncpa [#allocation9], 1

</llo_original>
